<compile_context>
chip_gen: v6e
topology: v6e:2x2x1
jax: 0.10.0
libtpu: 0.0.40
codegen_flags: <defaults>
</compile_context>

<pallas_src>
import functools

import jax
import jax.numpy as jnp
from jax.experimental import pallas as pl
from jax.experimental.pallas import tpu as pltpu


def _round_up(x, m):
    return ((x + m - 1) // m) * m


def _triplet_loss_kernel(a_ref, p_ref, n_ref, out_ref, acc_ref, *, margin, n_rows):
    step = pl.program_id(0)

    # Initialize the running sum on the first grid step.
    @pl.when(step == 0)
    def _():
        acc_ref[0, 0] = jnp.float32(0.0)

    # Load the (TILE_N, D) tiles; cast to f32 in-kernel (inputs may be bf16).
    a = a_ref[...].astype(jnp.float32)
    p = p_ref[...].astype(jnp.float32)
    n = n_ref[...].astype(jnp.float32)

    # Per-row euclidean distances, kept 2-D: (TILE_N, 1).
    dap = a - p
    dan = a - n
    dist_pos = jnp.sqrt(jnp.sum(dap * dap, axis=1, keepdims=True))
    dist_neg = jnp.sqrt(jnp.sum(dan * dan, axis=1, keepdims=True))

    # Hinge: relu(d_pos - d_neg + margin), shape (TILE_N, 1).
    hinge = jnp.maximum(dist_pos - dist_neg + jnp.float32(margin), jnp.float32(0.0))

    # Mask padded rows of the (possibly ragged) last tile.
    tile_n = a_ref.shape[0]
    row_idx = step * tile_n + jax.lax.broadcasted_iota(jnp.int32, (tile_n, 1), 0)
    hinge = jnp.where(row_idx < n_rows, hinge, jnp.float32(0.0))

    # Accumulate the SUM across grid steps.
    acc_ref[0, 0] += jnp.sum(hinge)

    # Finalize: divide by the true batch size exactly once.
    @pl.when(step == pl.num_programs(0) - 1)
    def _():
        out_ref[0, 0] = acc_ref[0, 0] / jnp.float32(n_rows)


def triplet_loss(anchor, positive, negative, margin=1.0, tile_n=None):
    """Pallas TPU implementation of TripletLoss.forward. Returns a 0-d float32."""
    assert anchor.shape == positive.shape == negative.shape
    assert anchor.ndim == 2
    n_rows, d = anchor.shape

    if tile_n is None:
        # Budget the per-buffer footprint against the lane-padded last dim:
        # 3 inputs x 2 pipeline buffers x tile_n x ceil(D/128)*128 x itemsize.
        # Target ~16 MiB of input buffers -> comfortably inside v7x's 64 MiB
        # VMEM and leaves v5e/v6e plenty of headroom.
        d_padded = _round_up(d, 128)
        itemsize = jnp.dtype(anchor.dtype).itemsize
        budget_bytes = 16 * 1024 * 1024
        tile_n = budget_bytes // (6 * d_padded * itemsize)
        tile_n = max(8, min(1024, tile_n))
        tile_n = _round_up(tile_n, 8)
        tile_n = min(tile_n, _round_up(n_rows, 8))  # no point exceeding padded N
    assert tile_n % 8 == 0 or tile_n == n_rows

    grid = (pl.cdiv(n_rows, tile_n),)
    kernel = functools.partial(
        _triplet_loss_kernel, margin=float(margin), n_rows=n_rows
    )

    in_spec = pl.BlockSpec((tile_n, d), lambda i: (i, 0))
    out = pl.pallas_call(
        kernel,
        out_shape=jax.ShapeDtypeStruct((1, 1), jnp.float32),
        grid_spec=pltpu.PrefetchScalarGridSpec(
            num_scalar_prefetch=0,
            grid=grid,
            in_specs=[in_spec, in_spec, in_spec],
            out_specs=pl.BlockSpec(
                (1, 1), lambda i: (0, 0), memory_space=pltpu.MemorySpace.SMEM
            ),
            scratch_shapes=[pltpu.SMEM((1, 1), jnp.float32)],
        ),
        compiler_params=pltpu.CompilerParams(
            dimension_semantics=("arbitrary",),
            vmem_limit_bytes=64 * 1024 * 1024,
        ),
    )(anchor, positive, negative)
    return out[0, 0]


def triplet_loss_ref(anchor, positive, negative, margin=1.0):
    """Pure-JAX reference matching the PyTorch module exactly (no eps, per spec)."""
    a = anchor.astype(jnp.float32)
    p = positive.astype(jnp.float32)
    n = negative.astype(jnp.float32)
    dp = jnp.sqrt(jnp.sum((a - p) ** 2, axis=1))
    dn = jnp.sqrt(jnp.sum((a - n) ** 2, axis=1))
    return jnp.mean(jnp.maximum(dp - dn + margin, 0.0))


if __name__ == "__main__":
    key = jax.random.PRNGKey(0)

    # Small shapes consistent with the module: N embeddings of dim D.
    N, D = 8, 32
    ka, kp, kn = jax.random.split(key, 3)
    anchor = jax.random.normal(ka, (N, D), dtype=jnp.float32)
    positive = jax.random.normal(kp, (N, D), dtype=jnp.float32)
    negative = jax.random.normal(kn, (N, D), dtype=jnp.float32)

    out = triplet_loss(anchor, positive, negative, margin=1.0)
    out = jax.block_until_ready(out)
    ref = triplet_loss_ref(anchor, positive, negative, margin=1.0)
    assert jnp.allclose(out, ref, atol=1e-5, rtol=1e-5), (out, ref)

    # Ragged multi-tile case: exercises the grid accumulator + last-tile mask.
    N2, D2 = 13, 32
    k2a, k2p, k2n = jax.random.split(jax.random.PRNGKey(1), 3)
    a2 = jax.random.normal(k2a, (N2, D2), dtype=jnp.float32)
    p2 = jax.random.normal(k2p, (N2, D2), dtype=jnp.float32)
    n2 = jax.random.normal(k2n, (N2, D2), dtype=jnp.float32)
    out2 = jax.block_until_ready(triplet_loss(a2, p2, n2, margin=0.5, tile_n=8))
    ref2 = triplet_loss_ref(a2, p2, n2, margin=0.5)
    assert jnp.allclose(out2, ref2, atol=1e-5, rtol=1e-5), (out2, ref2)

    print("KERNEL_OK")
</pallas_src>

<mosaic_0001>
module attributes {stable_mosaic.version = 11 : i64} {
  func.func @_triplet_loss_kernel(%arg0: i32, %arg1: memref<8x32xf32, #tpu.memory_space<vmem>>, %arg2: memref<8x32xf32, #tpu.memory_space<vmem>>, %arg3: memref<8x32xf32, #tpu.memory_space<vmem>>, %arg4: memref<1x1xf32, #tpu.memory_space<smem>>, %arg5: memref<1x1xf32, #tpu.memory_space<smem>>) attributes {dimension_semantics = [#tpu.dimension_semantics<arbitrary>], iteration_bounds = array<i64: 1>, scalar_prefetch = 0 : i64, scratch_operands = 1 : i64, tpu.core_type = #tpu.core_type<tc>, window_params = [{transform_indices = @transform_0, window_bounds = array<i64: 8, 32>}, {transform_indices = @transform_1, window_bounds = array<i64: 8, 32>}, {transform_indices = @transform_2, window_bounds = array<i64: 8, 32>}, {transform_indices = @transform_3, window_bounds = array<i64: 1, 1>}]} {
    %c0_i32 = arith.constant 0 : i32
    %0 = arith.cmpi eq, %arg0, %c0_i32 : i32
    %1 = arith.extui %0 : i1 to i32
    %c0_i32_0 = arith.constant 0 : i32
    %2 = arith.cmpi ne, %1, %c0_i32_0 : i32
    scf.if %2 {
      %cst_18 = arith.constant 0.000000e+00 : f32
      %c0_19 = arith.constant 0 : index
      %c0_20 = arith.constant 0 : index
      %39 = memref.load %arg5[%c0_19, %c0_20] : memref<1x1xf32, #tpu.memory_space<smem>>
      memref.store %cst_18, %arg5[%c0_19, %c0_20] : memref<1x1xf32, #tpu.memory_space<smem>>
    } else {
    }
    %c0 = arith.constant 0 : index
    %c0_1 = arith.constant 0 : index
    %3 = vector.load %arg1[%c0, %c0_1] : memref<8x32xf32, #tpu.memory_space<vmem>>, vector<8x32xf32>
    %c0_2 = arith.constant 0 : index
    %c0_3 = arith.constant 0 : index
    %4 = vector.load %arg2[%c0_2, %c0_3] : memref<8x32xf32, #tpu.memory_space<vmem>>, vector<8x32xf32>
    %c0_4 = arith.constant 0 : index
    %c0_5 = arith.constant 0 : index
    %5 = vector.load %arg3[%c0_4, %c0_5] : memref<8x32xf32, #tpu.memory_space<vmem>>, vector<8x32xf32>
    %6 = arith.subf %3, %4 : vector<8x32xf32>
    %7 = arith.subf %3, %5 : vector<8x32xf32>
    %8 = arith.mulf %6, %6 : vector<8x32xf32>
    %cst = arith.constant dense<0.000000e+00> : vector<8xf32>
    %9 = vector.multi_reduction <add>, %8, %cst [1] : vector<8x32xf32> to vector<8xf32>
    %10 = vector.shape_cast %9 : vector<8xf32> to vector<8x1xf32>
    %11 = math.sqrt %10 : vector<8x1xf32>
    %12 = arith.mulf %7, %7 : vector<8x32xf32>
    %cst_6 = arith.constant dense<0.000000e+00> : vector<8xf32>
    %13 = vector.multi_reduction <add>, %12, %cst_6 [1] : vector<8x32xf32> to vector<8xf32>
    %14 = vector.shape_cast %13 : vector<8xf32> to vector<8x1xf32>
    %15 = math.sqrt %14 : vector<8x1xf32>
    %16 = arith.subf %11, %15 : vector<8x1xf32>
    %cst_7 = arith.constant 1.000000e+00 : f32
    %17 = vector.broadcast %cst_7 : f32 to vector<8x1xf32>
    %18 = arith.addf %16, %17 : vector<8x1xf32>
    %cst_8 = arith.constant 0.000000e+00 : f32
    %19 = vector.broadcast %cst_8 : f32 to vector<8x1xf32>
    %20 = arith.maximumf %18, %19 : vector<8x1xf32>
    %c8_i32 = arith.constant 8 : i32
    %21 = arith.muli %arg0, %c8_i32 : i32
    %22 = tpu.iota {dimensions = array<i32: 0>} : vector<8x1xi32>
    %23 = vector.broadcast %21 : i32 to vector<8x1xi32>
    %24 = arith.addi %23, %22 : vector<8x1xi32>
    %c8_i32_9 = arith.constant 8 : i32
    %25 = vector.broadcast %c8_i32_9 : i32 to vector<8x1xi32>
    %26 = arith.cmpi slt, %24, %25 : vector<8x1xi32>
    %cst_10 = arith.constant 0.000000e+00 : f32
    %27 = vector.broadcast %cst_10 : f32 to vector<8x1xf32>
    %28 = arith.select %26, %20, %27 : vector<8x1xi1>, vector<8x1xf32>
    %c0_11 = arith.constant 0 : index
    %c0_12 = arith.constant 0 : index
    %29 = memref.load %arg5[%c0_11, %c0_12] : memref<1x1xf32, #tpu.memory_space<smem>>
    %30 = vector.shape_cast %28 : vector<8x1xf32> to vector<1x8x1xf32>
    %cst_13 = arith.constant dense<0.000000e+00> : vector<1xf32>
    %31 = vector.multi_reduction <add>, %30, %cst_13 [1, 2] : vector<1x8x1xf32> to vector<1xf32>
    %32 = vector.shape_cast %31 : vector<1xf32> to vector<1x1x1xf32>
    %33 = vector.extract %32[0, 0, 0] : f32 from vector<1x1x1xf32>
    %34 = arith.addf %29, %33 : f32
    %c0_14 = arith.constant 0 : index
    %c0_15 = arith.constant 0 : index
    %35 = memref.load %arg5[%c0_14, %c0_15] : memref<1x1xf32, #tpu.memory_space<smem>>
    memref.store %34, %arg5[%c0_14, %c0_15] : memref<1x1xf32, #tpu.memory_space<smem>>
    %c0_i32_16 = arith.constant 0 : i32
    %36 = arith.cmpi eq, %arg0, %c0_i32_16 : i32
    %37 = arith.extui %36 : i1 to i32
    %c0_i32_17 = arith.constant 0 : i32
    %38 = arith.cmpi ne, %37, %c0_i32_17 : i32
    scf.if %38 {
      %c0_18 = arith.constant 0 : index
      %c0_19 = arith.constant 0 : index
      %39 = memref.load %arg5[%c0_18, %c0_19] : memref<1x1xf32, #tpu.memory_space<smem>>
      %cst_20 = arith.constant 8.000000e+00 : f32
      %40 = arith.divf %39, %cst_20 : f32
      %c0_21 = arith.constant 0 : index
      %c0_22 = arith.constant 0 : index
      %41 = memref.load %arg4[%c0_21, %c0_22] : memref<1x1xf32, #tpu.memory_space<smem>>
      memref.store %40, %arg4[%c0_21, %c0_22] : memref<1x1xf32, #tpu.memory_space<smem>>
    } else {
    }
    return
  }
  func.func @transform_0(%arg0: i32) -> (i32, i32) {
    %c0_i32 = arith.constant 0 : i32
    %c0_i32_0 = arith.constant 0 : i32
    return %arg0, %c0_i32 : i32, i32
  }
  func.func @transform_1(%arg0: i32) -> (i32, i32) {
    %c0_i32 = arith.constant 0 : i32
    %c0_i32_0 = arith.constant 0 : i32
    return %arg0, %c0_i32 : i32, i32
  }
  func.func @transform_2(%arg0: i32) -> (i32, i32) {
    %c0_i32 = arith.constant 0 : i32
    %c0_i32_0 = arith.constant 0 : i32
    return %arg0, %c0_i32 : i32, i32
  }
  func.func @transform_3(%arg0: i32) -> (i32, i32) {
    %c0_i32 = arith.constant 0 : i32
    %c0_i32_0 = arith.constant 0 : i32
    %c0_i32_1 = arith.constant 0 : i32
    return %c0_i32, %c0_i32_0 : i32, i32
  }
}

</mosaic_0001>

<llo_original>
// kernel: tpu_custom_call.1
$region0: #{tpu_custom_call.1}
  #allocation0 [shape = 'u32[]', space=smem, size = 0x4, offset = 0x4, fixed_abs, tag = 'smem constant byte address 0x4 - core index']
  #allocation1 [shape = 'u32[144,128]{1,0:T(1,128)}', space=vmem, size = 0x12000, scoped, tag = 'internal scratch']
  #allocation2 [shape = 'f32[1,1]{1,0:T(1,128)}', space=smem, size = 0x200, scoped, tag = 'scratch operand']
  %s0 = inlined_call_operand.hbm [shape: f32[8,32], index: 0, kind: input, shape index: {}]
  %s1 = inlined_call_operand.hbm [shape: f32[8,32], index: 1, kind: input, shape index: {}]
  %s2 = inlined_call_operand.hbm [shape: f32[8,32], index: 2, kind: input, shape index: {}]
  %s3 = inlined_call_operand.hbm [shape: f32[1,1], index: 3, kind: output, shape index: {}]
  %s4 = sld [smem:[#allocation0]]
  $region42: #{tpu_custom_call.1} parent=0
    _
  %s6 = ssub.s32 1, %s4
  %s7 = scalar_select 0, %s6, %s4
  $region1: #{tpu_custom_call.1} parent=0
    #allocation3 [shape = 'u8[4096]{0}', space=vmem, size = 0x1000, scoped, tag = 'input window, operand 0, single buffered']
    #allocation4 [shape = 's32[1]{0}', space=sflag, size = 0x4, scoped, tag = 'scoped memory for tpu_custom_call.1']
    #allocation5 [shape = 's32[1]{0}', space=sflag, size = 0x4, scoped, tag = 'scoped memory for tpu_custom_call.1']
    #allocation6 [shape = 'u8[4096]{0}', space=vmem, size = 0x1000, scoped, tag = 'input window, operand 1, single buffered']
    #allocation7 [shape = 's32[1]{0}', space=sflag, size = 0x4, scoped, tag = 'scoped memory for tpu_custom_call.1']
    #allocation8 [shape = 'u8[4096]{0}', space=vmem, size = 0x1000, scoped, tag = 'input window, operand 2, single buffered']
    #allocation9 [shape = 'u8[512]{0}', space=smem, size = 0x200, scoped, tag = 'output window, operand 0, single buffered']
    %8 = vsyncpa [#allocation4], 0
    %9 = vsyncpa [#allocation7], 0
    %10 = vsyncpa [#allocation5], 0
    // Predicated region
    $region2: #{tpu_custom_call.1} parent=1 // pred_check
      _
    $region3: #{tpu_custom_call.1} parent=1 // pred_check_branch
      %12 = sbr.rel (0) target = $region5
    $region4: #{tpu_custom_call.1} parent=1 // pred_region
      %s14 = ssub.s32 128, 128
      %15 = vsyncadd [#allocation4], %s14
      %s17 = sshll.u32 [#allocation3], 4
      %s18 = int_to_ptr.vmem [resolvable:$true] %s17
      %20 = dma.hbm_to_vmem [thread:$0]  %s0, 128, %s18, [#allocation4]
    $region5: #{tpu_custom_call.1} parent=1 // pred_fallthru
      _
    // Predicated region
    $region6: #{tpu_custom_call.1} parent=1 // pred_check
      _
    $region7: #{tpu_custom_call.1} parent=1 // pred_check_branch
      %22 = sbr.rel (0) target = $region9
    $region8: #{tpu_custom_call.1} parent=1 // pred_region
      %s24 = ssub.s32 128, 128
      %25 = vsyncadd [#allocation7], %s24
      %s27 = sshll.u32 [#allocation6], 4
      %s28 = int_to_ptr.vmem [resolvable:$true] %s27
      %30 = dma.hbm_to_vmem [thread:$0]  %s1, 128, %s28, [#allocation7]
    $region9: #{tpu_custom_call.1} parent=1 // pred_fallthru
      _
    // Predicated region
    $region10: #{tpu_custom_call.1} parent=1 // pred_check
      _
    $region11: #{tpu_custom_call.1} parent=1 // pred_check_branch
      %32 = sbr.rel (0) target = $region13
    $region12: #{tpu_custom_call.1} parent=1 // pred_region
      %s34 = ssub.s32 128, 128
      %35 = vsyncadd [#allocation7], %s34
      %s37 = sshll.u32 [#allocation8], 4
      %s38 = int_to_ptr.vmem [resolvable:$true] %s37
      %40 = dma.hbm_to_vmem [thread:$0]  %s2, 128, %s38, [#allocation7]
    $region13: #{tpu_custom_call.1} parent=1 // pred_fallthru
      _
    // Predicated region
    $region14: #{tpu_custom_call.1} parent=1 // pred_check
      _
    $region15: #{tpu_custom_call.1} parent=1 // pred_check_branch
      %42 = sbr.rel (0) target = $region17
    $region16: #{tpu_custom_call.1} parent=1 // pred_region
      %43 = dma.done [#allocation4], 128
    $region17: #{tpu_custom_call.1} parent=1 // pred_fallthru
      _
    // Predicated region
    $region18: #{tpu_custom_call.1} parent=1 // pred_check
      _
    $region19: #{tpu_custom_call.1} parent=1 // pred_check_branch
      %45 = sbr.rel (0) target = $region21
    $region20: #{tpu_custom_call.1} parent=1 // pred_region
      %46 = dma.done [#allocation7], 128
    $region21: #{tpu_custom_call.1} parent=1 // pred_fallthru
      _
    // Predicated region
    $region22: #{tpu_custom_call.1} parent=1 // pred_check
      _
    $region23: #{tpu_custom_call.1} parent=1 // pred_check_branch
      %48 = sbr.rel (0) target = $region25
    $region24: #{tpu_custom_call.1} parent=1 // pred_region
      %49 = dma.done [#allocation7], 128
    $region25: #{tpu_custom_call.1} parent=1 // pred_fallthru
      _
    %p50 = scmp.eq.s32.totalorder 0, 0
    // Predicated region
    $region26: #{tpu_custom_call.1} parent=1 // pred_check
      %p51 = pneg %p50
    $region27: #{tpu_custom_call.1} parent=1 // pred_check_branch
      %53 = sbr.rel (%p51) target = $region29
    $region28: #{tpu_custom_call.1} parent=1 // pred_region
      %s54 = scalar_lea.smem [#allocation2], 0
      %55 = sst [smem:[%s54]] 0.0
    $region29: #{tpu_custom_call.1} parent=1 // pred_fallthru
      _
    %v56 = vld [vmem:[#allocation3] sm:$0xff]
    %v57 = vld [vmem:[#allocation6] sm:$0xff]
    %v58 = vld [vmem:[#allocation8] sm:$0xff]
    %v59 = vsub.f32 %v56, %v57
    %v60 = vsub.f32 %v56, %v58
    %v61 = vmul.f32 %v59, %v59
    %vm62 = vcmask 261120
    %v63 = vsel %vm62, %v61, 0.0
    %64 = vadd.xlane.f32.xlu0 %v63
    %v65 = vpop.xlane.xlu0 %64
    %v66 = vrsqrt.pop %v65
    %v67 = vmul.f32 %v65, %v66
    %vm68 = vcmp.eq.f32.partialorder %v65, inf
    %v69 = vsel %vm68, %v65, %v67
    %vm70 = vcmp.eq.f32.partialorder %v65, 0.0
    %v71 = vand.u32 %v65, 2147483648
    %v72 = vsel %vm70, %v71, %v69
    %v73 = vmul.f32 %v60, %v60
    %v74 = vsel %vm62, %v73, 0.0
    %75 = vadd.xlane.f32.xlu0 %v74
    %v76 = vpop.xlane.xlu0 %75
    %v77 = vrsqrt.pop %v76
    %v78 = vmul.f32 %v76, %v77
    %vm79 = vcmp.eq.f32.partialorder %v76, inf
    %v80 = vsel %vm79, %v76, %v78
    %vm81 = vcmp.eq.f32.partialorder %v76, 0.0
    %v82 = vand.u32 %v76, 2147483648
    %v83 = vsel %vm81, %v82, %v80
    %v84 = vsub.f32 %v72, %v83
    %v85 = vadd.f32 %v84, 1.0
    %v86 = vmax.f32 %v85, 0.0
    %s87 = smul.u32 0, 8
    %v88 = vlaneseq
    %v89 = vshrl.u32 %v88, 7
    %v90 = vstv %s87
    %v91 = vadd.s32 %v90, %v89
    %vm92 = vcmp.lt.s32.totalorder %v91, 8
    %v93 = vsel %vm92, %v86, 0.0
    %s94 = sld [smem:[#allocation2]]
    %vm95 = vcmask 7168
    %v96 = vsel %vm95, %v93, 0.0
    %97 = vadd.xlane.f32.xlu0 %v96
    %v98 = vpop.xlane.xlu0 %97
    %v99 = vrot.slane %v98, 4
    %v100 = vadd.f32 %v98, %v99
    %v101 = vrot.slane %v100, 2
    %v102 = vadd.f32 %v100, %v101
    %v103 = vrot.slane %v102, 1
    %v104 = vadd.f32 %v102, %v103
    %s105 = vtos %v104
    %s106 = sadd.f32 %s94, %s105
    %s107 = scalar_lea.smem [#allocation2], 0
    %108 = sst [smem:[%s107]] %s106
    // Predicated region
    $region30: #{tpu_custom_call.1} parent=1 // pred_check
      %p109 = pneg %p50
    $region31: #{tpu_custom_call.1} parent=1 // pred_check_branch
      %111 = sbr.rel (%p109) target = $region33
    $region32: #{tpu_custom_call.1} parent=1 // pred_region
      %s112 = sld [smem:[#allocation2]]
      %v113 = vrcp.pop 8.0
      %s114 = vtos %v113
      %s115 = smul.f32 %s112, %s114
      %s116 = scalar_lea.smem [#allocation9], 0
      %117 = sst [smem:[%s116]] %s115
    $region33: #{tpu_custom_call.1} parent=1 // pred_fallthru
      _
    // Predicated region
    $region34: #{tpu_custom_call.1} parent=1 // pred_check
      _
    $region35: #{tpu_custom_call.1} parent=1 // pred_check_branch
      %119 = sbr.rel (0) target = $region37
    $region36: #{tpu_custom_call.1} parent=1 // pred_region
      %s121 = ssub.s32 16, 16
      %122 = vsyncadd [#allocation5], %s121
      %125 = dma.smem_to_hbm [#allocation9], 16, %s3, [#allocation5]
    $region37: #{tpu_custom_call.1} parent=1 // pred_fallthru
      _
    // Predicated region
    $region38: #{tpu_custom_call.1} parent=1 // pred_check
      _
    $region39: #{tpu_custom_call.1} parent=1 // pred_check_branch
      %127 = sbr.rel (0) target = $region41
    $region40: #{tpu_custom_call.1} parent=1 // pred_region
      %128 = dma.done [#allocation5], 16
    $region41: #{tpu_custom_call.1} parent=1 // pred_fallthru
      _
    %129 = sfence
    %130 = vsyncpa [#allocation4], 1
    %131 = vsyncpa [#allocation7], 1
    %132 = vsyncpa [#allocation5], 1

</llo_original>
